<compile_context>
chip_gen: v7x
topology: tpu7x:2x2x1
jax: 0.10.0
libtpu: 0.0.40
codegen_flags: <defaults>
</compile_context>

<pallas_src>
import jax
import jax.numpy as jnp
from jax.experimental import pallas as pl
from jax.experimental.pallas import tpu as pltpu


def _round_up(x, m):
    return ((x + m - 1) // m) * m


def _pad_to(x, axis, target):
    pad = target - x.shape[axis]
    if pad <= 0:
        return x
    widths = [(0, 0)] * x.ndim
    widths[axis] = (0, pad)
    return jnp.pad(x, widths)


def _vmem_budget_bytes():
    # Conservative default: v7x has 64 MiB physical VMEM per TensorCore.
    phys = 64 << 20
    try:
        info = pltpu.get_tpu_info()
        cap = getattr(info, "vmem_capacity_bytes", None)
        if cap:
            phys = int(cap)
    except Exception:
        pass
    # ~96 MB on v5e/v6e (128 MiB), ~48 MB on v7x (64 MiB).
    return int(phys * 0.75)


def _choose_tn(n):
    # Largest of {512, 256, 128} that still gives >= 2 node tiles so the
    # "parallel" grid axis can feed both TensorCores on v7x; 128 as a floor.
    for tn in (512, 256):
        if n >= 2 * tn:
            return tn
    return 128


def _sage_resident_kernel(adj_ref, feat_ref, self_ref, inv_deg_ref,
                          ws_ref, wn_ref, out_ref):
    # adj_ref:     [TN, Mp] bf16   0/1 neighbor mask tile
    # feat_ref:    [Mp, Fp] bf16   full feature table (VMEM-resident, const idx)
    # self_ref:    [TN, Fp] bf16   gathered self features
    # inv_deg_ref: [TN, 1 ] f32    1 / max(degree, 1)
    # ws_ref:      [Fp, Ep] bf16   W[:, :F].T (pre-transposed)
    # wn_ref:      [Fp, Ep] bf16   W[:, F:].T (pre-transposed)
    # out_ref:     [TN, Ep] f32
    neigh = jnp.dot(adj_ref[...], feat_ref[...],
                    preferred_element_type=jnp.float32)
    neigh = (neigh * inv_deg_ref[...]).astype(jnp.bfloat16)
    out = jnp.dot(self_ref[...], ws_ref[...],
                  preferred_element_type=jnp.float32)
    out = out + jnp.dot(neigh, wn_ref[...],
                        preferred_element_type=jnp.float32)
    out_ref[...] = jnp.maximum(out, 0.0)


def _sage_streamed_kernel(adj_ref, feat_ref, self_ref, inv_deg_ref,
                          ws_ref, wn_ref, out_ref, acc_ref):
    # Fallback when the feature table does not fit VMEM: accumulate neighbor
    # sums over the M-tile (reduction) axis in an f32 VMEM scratch.
    m = pl.program_id(1)

    @pl.when(m == 0)
    def _():
        acc_ref[...] = jnp.zeros_like(acc_ref)

    acc_ref[...] += jnp.dot(adj_ref[...], feat_ref[...],
                            preferred_element_type=jnp.float32)

    @pl.when(m == pl.num_programs(1) - 1)
    def _():
        neigh = (acc_ref[...] * inv_deg_ref[...]).astype(jnp.bfloat16)
        out = jnp.dot(self_ref[...], ws_ref[...],
                      preferred_element_type=jnp.float32)
        out = out + jnp.dot(neigh, wn_ref[...],
                            preferred_element_type=jnp.float32)
        out_ref[...] = jnp.maximum(out, 0.0)


@jax.jit
def graphsage_forward(adj_mask, features, nodes, weight):
    """adj_mask: [N, M] 0/1 (f32 or bf16), features: [M, F] (f32 or bf16),
    nodes: [N] i32, weight: [E, 2F].  Returns [E, N] f32 (PyTorch layout)."""
    N, M = adj_mask.shape
    Mf, F = features.shape
    E, twoF = weight.shape
    assert Mf == M and twoF == 2 * F

    vmem_budget = _vmem_budget_bytes()
    tn = _choose_tn(N)
    Np = _round_up(N, tn)
    Fp = _round_up(F, 128)
    Ep = _round_up(E, 128)

    # Degree normalizer from the *unpadded* mask, exact f32 accumulation.
    inv_deg = 1.0 / jnp.maximum(
        jnp.sum(adj_mask, axis=1, keepdims=True, dtype=jnp.float32), 1.0)
    inv_deg = _pad_to(inv_deg, 0, Np)

    # Split + pre-transpose the encoder weight (lane-dense [F, E] RHS).
    w_self_t = _pad_to(_pad_to(weight[:, :F].T.astype(jnp.bfloat16), 0, Fp), 1, Ep)
    w_neigh_t = _pad_to(_pad_to(weight[:, F:].T.astype(jnp.bfloat16), 0, Fp), 1, Ep)

    # bf16 streaming; no-op casts if the caller already pre-cast.
    adj_bf = adj_mask.astype(jnp.bfloat16)
    feat_bf = _pad_to(features.astype(jnp.bfloat16), 1, Fp)
    self_bf = _pad_to(
        jnp.take(features, nodes, axis=0).astype(jnp.bfloat16), 1, Fp)
    self_bf = _pad_to(self_bf, 0, Np)

    # Can the whole feature table live in VMEM (double-buffer worst case)?
    Mp_res = _round_up(M, 256)
    resident_bytes = 2 * (Mp_res * Fp * 2          # feature table
                          + tn * Mp_res * 2        # adjacency tile
                          + tn * Fp * 2            # self-feature tile
                          + 2 * Fp * Ep * 2        # both weights
                          + tn * Ep * 4            # output tile
                          + tn * 4)                # 1/deg
    use_resident = resident_bytes <= vmem_budget

    if use_resident:
        Mp = Mp_res
        adj_p = _pad_to(_pad_to(adj_bf, 0, Np), 1, Mp)
        feat_p = _pad_to(feat_bf, 0, Mp)
        grid = (Np // tn,)

        cost = pl.CostEstimate(
            flops=2 * Np * Mp * Fp + 4 * Np * Fp * Ep,
            transcendentals=0,
            bytes_accessed=(adj_p.size * 2 + feat_p.size * 2 + self_bf.size * 2
                            + inv_deg.size * 4
                            + (w_self_t.size + w_neigh_t.size) * 2
                            + Np * Ep * 4),
        )

        out_ne = pl.pallas_call(
            _sage_resident_kernel,
            out_shape=jax.ShapeDtypeStruct((Np, Ep), jnp.float32),
            grid_spec=pltpu.PrefetchScalarGridSpec(
                num_scalar_prefetch=0,
                grid=grid,
                in_specs=[
                    pl.BlockSpec((tn, Mp), lambda n: (n, 0)),   # adjacency tile
                    pl.BlockSpec((Mp, Fp), lambda n: (0, 0)),   # resident features
                    pl.BlockSpec((tn, Fp), lambda n: (n, 0)),   # self features
                    pl.BlockSpec((tn, 1), lambda n: (n, 0)),    # 1/deg
                    pl.BlockSpec((Fp, Ep), lambda n: (0, 0)),   # W_self^T
                    pl.BlockSpec((Fp, Ep), lambda n: (0, 0)),   # W_neigh^T
                ],
                out_specs=pl.BlockSpec((tn, Ep), lambda n: (n, 0)),
            ),
            compiler_params=pltpu.CompilerParams(
                dimension_semantics=("parallel",),
                vmem_limit_bytes=vmem_budget,
            ),
            cost_estimate=cost,
        )(adj_p, feat_p, self_bf, inv_deg, w_self_t, w_neigh_t)
    else:
        tm = 1024
        Mp = _round_up(M, tm)
        adj_p = _pad_to(_pad_to(adj_bf, 0, Np), 1, Mp)
        feat_p = _pad_to(feat_bf, 0, Mp)
        grid = (Np // tn, Mp // tm)

        cost = pl.CostEstimate(
            flops=2 * Np * Mp * Fp + 4 * Np * Fp * Ep,
            transcendentals=0,
            bytes_accessed=(adj_p.size * 2 + feat_p.size * 2 * grid[0]
                            + self_bf.size * 2 + inv_deg.size * 4
                            + (w_self_t.size + w_neigh_t.size) * 2
                            + Np * Ep * 4),
        )

        out_ne = pl.pallas_call(
            _sage_streamed_kernel,
            out_shape=jax.ShapeDtypeStruct((Np, Ep), jnp.float32),
            grid_spec=pltpu.PrefetchScalarGridSpec(
                num_scalar_prefetch=0,
                grid=grid,
                in_specs=[
                    pl.BlockSpec((tn, tm), lambda n, m: (n, m)),   # adjacency tile
                    pl.BlockSpec((tm, Fp), lambda n, m: (m, 0)),   # feature tile
                    pl.BlockSpec((tn, Fp), lambda n, m: (n, 0)),   # self features
                    pl.BlockSpec((tn, 1), lambda n, m: (n, 0)),    # 1/deg
                    pl.BlockSpec((Fp, Ep), lambda n, m: (0, 0)),   # W_self^T
                    pl.BlockSpec((Fp, Ep), lambda n, m: (0, 0)),   # W_neigh^T
                ],
                out_specs=pl.BlockSpec((tn, Ep), lambda n, m: (n, 0)),
                scratch_shapes=[pltpu.VMEM((tn, Fp), jnp.float32)],
            ),
            compiler_params=pltpu.CompilerParams(
                dimension_semantics=("parallel", "arbitrary"),
                vmem_limit_bytes=vmem_budget,
            ),
            cost_estimate=cost,
        )(adj_p, feat_p, self_bf, inv_deg, w_self_t, w_neigh_t)

    # Lane-dense [Np, Ep] -> strip padding, return the module's [E, N] layout.
    return out_ne[:N, :E].T


def _reference(adj_mask, features, nodes, weight):
    self_feats = jnp.take(features, nodes, axis=0)
    deg = jnp.maximum(jnp.sum(adj_mask, axis=1, keepdims=True), 1.0)
    neigh = (adj_mask @ features) / deg
    combined = jnp.concatenate([self_feats, neigh], axis=1)
    return jnp.maximum(weight @ combined.T, 0.0)


if __name__ == "__main__":
    key = jax.random.PRNGKey(0)
    k_feat, k_adj, k_w, k_nodes = jax.random.split(key, 4)

    M = 512   # total nodes in the graph
    F = 128   # feature dim
    N = 256   # batch of query nodes
    E = 128   # embed dim of the encoder

    features = jax.random.normal(k_feat, (M, F), dtype=jnp.float32)
    # Deterministic random adjacency mask (0/1), ~25% density.
    adj_mask = (jax.random.uniform(k_adj, (N, M)) < 0.25).astype(jnp.float32)
    # Deterministic init for the encoder weight (xavier-ish scale).
    weight = jax.random.normal(k_w, (E, 2 * F), dtype=jnp.float32) * 0.1
    nodes = jax.random.randint(k_nodes, (N,), 0, M, dtype=jnp.int32)

    out = graphsage_forward(adj_mask, features, nodes, weight)
    out = jax.block_until_ready(out)

    ref = _reference(adj_mask, features, nodes, weight)
    assert out.shape == (E, N)
    # bf16 streaming everywhere (features, adjacency, self feats, weights) with
    # f32 accumulation -> loosened tolerance vs. the f32 reference.
    assert jnp.allclose(out, ref, atol=5e-2, rtol=2e-2), float(
        jnp.max(jnp.abs(out - ref)))

    print("KERNEL_OK")
</pallas_src>

<mosaic_0001>
module attributes {stable_mosaic.version = 11 : i64} {
  func.func @_sage_resident_kernel(%arg0: i32, %arg1: memref<128x512xbf16, #tpu.memory_space<vmem>>, %arg2: memref<512x128xbf16, #tpu.memory_space<vmem>>, %arg3: memref<128x128xbf16, #tpu.memory_space<vmem>>, %arg4: memref<128x1xf32, #tpu.memory_space<vmem>>, %arg5: memref<128x128xbf16, #tpu.memory_space<vmem>>, %arg6: memref<128x128xbf16, #tpu.memory_space<vmem>>, %arg7: memref<128x128xf32, #tpu.memory_space<vmem>>) attributes {dimension_semantics = [#tpu.dimension_semantics<parallel>], iteration_bounds = array<i64: 2>, scalar_prefetch = 0 : i64, scratch_operands = 0 : i64, tpu.core_type = #tpu.core_type<tc>, window_params = [{transform_indices = @transform_0, window_bounds = array<i64: 128, 512>}, {pipeline_mode = #tpu.pipeline_mode<synchronous>, transform_indices = @transform_1, window_bounds = array<i64: 512, 128>}, {transform_indices = @transform_2, window_bounds = array<i64: 128, 128>}, {transform_indices = @transform_3, window_bounds = array<i64: 128, 1>}, {pipeline_mode = #tpu.pipeline_mode<synchronous>, transform_indices = @transform_4, window_bounds = array<i64: 128, 128>}, {pipeline_mode = #tpu.pipeline_mode<synchronous>, transform_indices = @transform_5, window_bounds = array<i64: 128, 128>}, {transform_indices = @transform_6, window_bounds = array<i64: 128, 128>}]} {
    %c0 = arith.constant 0 : index
    %c0_0 = arith.constant 0 : index
    %0 = vector.load %arg1[%c0, %c0_0] : memref<128x512xbf16, #tpu.memory_space<vmem>>, vector<128x512xbf16>
    %c0_1 = arith.constant 0 : index
    %c0_2 = arith.constant 0 : index
    %1 = vector.load %arg2[%c0_1, %c0_2] : memref<512x128xbf16, #tpu.memory_space<vmem>>, vector<512x128xbf16>
    %cst = arith.constant dense<0.000000e+00> : vector<128x128xf32>
    %2 = tpu.matmul %0, %1, %cst {dimension_numbers = #tpu.dot_dimension_numbers<[1], [0], [0], [1], [0, 0, 1, 1], [], []>} : vector<128x512xbf16>, vector<512x128xbf16>, vector<128x128xf32> -> vector<128x128xf32>
    %c0_3 = arith.constant 0 : index
    %c0_4 = arith.constant 0 : index
    %3 = vector.load %arg4[%c0_3, %c0_4] : memref<128x1xf32, #tpu.memory_space<vmem>>, vector<128x1xf32>
    %4 = vector.broadcast %3 : vector<128x1xf32> to vector<128x128xf32>
    %5 = arith.mulf %2, %4 : vector<128x128xf32>
    %6 = arith.truncf %5 : vector<128x128xf32> to vector<128x128xbf16>
    %c0_5 = arith.constant 0 : index
    %c0_6 = arith.constant 0 : index
    %7 = vector.load %arg3[%c0_5, %c0_6] : memref<128x128xbf16, #tpu.memory_space<vmem>>, vector<128x128xbf16>
    %c0_7 = arith.constant 0 : index
    %c0_8 = arith.constant 0 : index
    %8 = vector.load %arg5[%c0_7, %c0_8] : memref<128x128xbf16, #tpu.memory_space<vmem>>, vector<128x128xbf16>
    %cst_9 = arith.constant dense<0.000000e+00> : vector<128x128xf32>
    %9 = tpu.matmul %7, %8, %cst_9 {dimension_numbers = #tpu.dot_dimension_numbers<[1], [0], [0], [1], [0, 0, 1, 1], [], []>} : vector<128x128xbf16>, vector<128x128xbf16>, vector<128x128xf32> -> vector<128x128xf32>
    %c0_10 = arith.constant 0 : index
    %c0_11 = arith.constant 0 : index
    %10 = vector.load %arg6[%c0_10, %c0_11] : memref<128x128xbf16, #tpu.memory_space<vmem>>, vector<128x128xbf16>
    %cst_12 = arith.constant dense<0.000000e+00> : vector<128x128xf32>
    %11 = tpu.matmul %6, %10, %cst_12 {dimension_numbers = #tpu.dot_dimension_numbers<[1], [0], [0], [1], [0, 0, 1, 1], [], []>} : vector<128x128xbf16>, vector<128x128xbf16>, vector<128x128xf32> -> vector<128x128xf32>
    %12 = arith.addf %9, %11 : vector<128x128xf32>
    %cst_13 = arith.constant 0.000000e+00 : f32
    %13 = vector.broadcast %cst_13 : f32 to vector<128x128xf32>
    %14 = arith.maximumf %12, %13 : vector<128x128xf32>
    %c0_14 = arith.constant 0 : index
    %c0_15 = arith.constant 0 : index
    %15 = vector.load %arg7[%c0_14, %c0_15] : memref<128x128xf32, #tpu.memory_space<vmem>>, vector<128x128xf32>
    tpu.vector_store %arg7[%c0_14, %c0_15], %14 {strides = array<i32>} : memref<128x128xf32, #tpu.memory_space<vmem>>, vector<128x128xf32>,
    return
  }
  func.func @transform_0(%arg0: i32) -> (i32, i32) {
    %c0_i32 = arith.constant 0 : i32
    %c0_i32_0 = arith.constant 0 : i32
    return %arg0, %c0_i32 : i32, i32
  }
  func.func @transform_1(%arg0: i32) -> (i32, i32) {
    %c0_i32 = arith.constant 0 : i32
    %c0_i32_0 = arith.constant 0 : i32
    %c0_i32_1 = arith.constant 0 : i32
    return %c0_i32, %c0_i32_0 : i32, i32
  }
  func.func @transform_2(%arg0: i32) -> (i32, i32) {
    %c0_i32 = arith.constant 0 : i32
    %c0_i32_0 = arith.constant 0 : i32
    return %arg0, %c0_i32 : i32, i32
  }
  func.func @transform_3(%arg0: i32) -> (i32, i32) {
    %c0_i32 = arith.constant 0 : i32
    %c0_i32_0 = arith.constant 0 : i32
    return %arg0, %c0_i32 : i32, i32
  }
  func.func @transform_4(%arg0: i32) -> (i32, i32) {
    %c0_i32 = arith.constant 0 : i32
    %c0_i32_0 = arith.constant 0 : i32
    %c0_i32_1 = arith.constant 0 : i32
    return %c0_i32, %c0_i32_0 : i32, i32
  }
  func.func @transform_5(%arg0: i32) -> (i32, i32) {
    %c0_i32 = arith.constant 0 : i32
    %c0_i32_0 = arith.constant 0 : i32
    %c0_i32_1 = arith.constant 0 : i32
    return %c0_i32, %c0_i32_0 : i32, i32
  }
  func.func @transform_6(%arg0: i32) -> (i32, i32) {
    %c0_i32 = arith.constant 0 : i32
    %c0_i32_0 = arith.constant 0 : i32
    return %arg0, %c0_i32 : i32, i32
  }
}

</mosaic_0001>

<llo_original>
// kernel: graphsage_forward.1
$region0: #{graphsage_forward.1}
  #allocation0 [shape = 'u32[]', space=smem, size = 0x4, offset = 0x4, fixed_abs, tag = 'smem constant byte address 0x4 - core index']
  #allocation1 [shape = 'u32[144,128]{1,0:T(1,128)}', space=vmem, size = 0x12000, scoped, tag = 'internal scratch']
  %s0 = inlined_call_operand.vmem [shape: bf16[256,512], index: 0, kind: input, shape index: {}]
  %s1 = inlined_call_operand.vmem [shape: bf16[512,128], index: 1, kind: input, shape index: {}]
  %s2 = inlined_call_operand.vmem [shape: bf16[256,128], index: 2, kind: input, shape index: {}]
  %s3 = inlined_call_operand.vmem [shape: f32[256,1], index: 3, kind: input, shape index: {}]
  %s4 = inlined_call_operand.vmem [shape: bf16[128,128], index: 4, kind: input, shape index: {}]
  %s5 = inlined_call_operand.vmem [shape: bf16[128,128], index: 5, kind: input, shape index: {}]
  %s6 = inlined_call_operand.vmem [shape: f32[256,128], index: 6, kind: output, shape index: {}]
  %s7 = sld [smem:[#allocation0]]
  $region57: #{graphsage_forward.1} parent=0
    _
  %s9 = ssub.s32 1, %s7
  %s10 = scalar_select 0, %s9, %s7
  loop: start=0, step=1, limit=4
  $region2: #{graphsage_forward.1} parent=0 // loop_pre_header
    _
  $region3: #{graphsage_forward.1} parent=0 // loop_header
    %s12 = sphi 0, %s16
    %p13 = scmp.ge.s32.totalorder %s12, 4
    %s22 = sphi 0, %s24
    %s25 = sphi 0, %s22
    %s26 = sphi 0, %s25
    %s42 = sphi 0, %s26
    %s46 = sphi 0, %s46
    %s48 = sphi 0, %s46
    %s49 = sphi 0, %s48
    %s63 = sphi 0, %s49
    %s69 = sphi 0, %s71
    %s72 = sphi 0, %s69
    %s73 = sphi 0, %s72
    %s89 = sphi 0, %s73
    %s95 = sphi 0, %s97
    %s98 = sphi 0, %s95
    %s99 = sphi 0, %s98
    %s115 = sphi 0, %s99
    %s119 = sphi 0, %s119
    %s121 = sphi 0, %s119
    %s122 = sphi 0, %s121
    %s136 = sphi 0, %s122
    %s140 = sphi 0, %s140
    %s142 = sphi 0, %s140
    %s143 = sphi 0, %s142
    %s157 = sphi 0, %s143
    %s163 = sphi 0, %s165
    %s166 = sphi 0, %s163
    %s167 = sphi 0, %s166
    %s183 = sphi 0, %s167
  $region4: #{graphsage_forward.1} parent=0 // loop_header_branch
    %15 = sbr.rel (%p13) target = $region8
  $region5: #{graphsage_forward.1} parent=0 // loop_body
    %s17 = ssub.s32 %s12, 1
    %s18 = ssub.s32 %s12, 2
    %s19 = sadd.s32 %s12, 1
    %s20 = ssub.s32 %s12, %s19
    %p21 = scmp.eq.s32.totalorder %s20, 0
    %s23 = sadd.s32 %s22, 1
    %s24 = scalar_select %p21, %s22, %s23
    %p27 = pneg %p21
    %p28 = scmp.eq.s32.totalorder %s12, 1
    %p29 = por %p27, %p28
    %p30 = scmp.ne.s32.totalorder %s22, %s25
    %p31 = scmp.eq.s32.totalorder %s12, 0
    %p32 = por %p30, %p31
    %p33 = scmp.ne.s32.totalorder %s22, %s25
    %p34 = scmp.eq.s32.totalorder %s17, 1
    %p35 = por %p33, %p34
    %p36 = scmp.ne.s32.totalorder %s25, %s26
    %p37 = scmp.eq.s32.totalorder %s17, 0
    %p38 = por %p36, %p37
    %p39 = scmp.ne.s32.totalorder %s25, %s26
    %p40 = scmp.eq.s32.totalorder %s18, 1
    %p41 = por %p39, %p40
    %p43 = scmp.ne.s32.totalorder %s26, %s42
    %p44 = scmp.eq.s32.totalorder %s18, 0
    %p45 = por %p43, %p44
    %s47 = sadd.s32 %s46, 1
    %p50 = scmp.eq.s32.totalorder %s12, 1
    %p51 = scmp.ne.s32.totalorder %s46, %s48
    %p52 = scmp.eq.s32.totalorder %s12, 0
    %p53 = por %p51, %p52
    %p54 = scmp.ne.s32.totalorder %s46, %s48
    %p55 = scmp.eq.s32.totalorder %s17, 1
    %p56 = por %p54, %p55
    %p57 = scmp.ne.s32.totalorder %s48, %s49
    %p58 = scmp.eq.s32.totalorder %s17, 0
    %p59 = por %p57, %p58
    %p60 = scmp.ne.s32.totalorder %s48, %s49
    %p61 = scmp.eq.s32.totalorder %s18, 1
    %p62 = por %p60, %p61
    %p64 = scmp.ne.s32.totalorder %s49, %s63
    %p65 = scmp.eq.s32.totalorder %s18, 0
    %p66 = por %p64, %p65
    %s67 = ssub.s32 %s12, %s19
    %p68 = scmp.eq.s32.totalorder %s67, 0
    %s70 = sadd.s32 %s69, 1
    %s71 = scalar_select %p68, %s69, %s70
    %p74 = pneg %p68
    %p75 = scmp.eq.s32.totalorder %s12, 1
    %p76 = por %p74, %p75
    %p77 = scmp.ne.s32.totalorder %s69, %s72
    %p78 = scmp.eq.s32.totalorder %s12, 0
    %p79 = por %p77, %p78
    %p80 = scmp.ne.s32.totalorder %s69, %s72
    %p81 = scmp.eq.s32.totalorder %s17, 1
    %p82 = por %p80, %p81
    %p83 = scmp.ne.s32.totalorder %s72, %s73
    %p84 = scmp.eq.s32.totalorder %s17, 0
    %p85 = por %p83, %p84
    %p86 = scmp.ne.s32.totalorder %s72, %s73
    %p87 = scmp.eq.s32.totalorder %s18, 1
    %p88 = por %p86, %p87
    %p90 = scmp.ne.s32.totalorder %s73, %s89
    %p91 = scmp.eq.s32.totalorder %s18, 0
    %p92 = por %p90, %p91
    %s93 = ssub.s32 %s12, %s19
    %p94 = scmp.eq.s32.totalorder %s93, 0
    %s96 = sadd.s32 %s95, 1
    %s97 = scalar_select %p94, %s95, %s96
    %p100 = pneg %p94
    %p101 = scmp.eq.s32.totalorder %s12, 1
    %p102 = por %p100, %p101
    %p103 = scmp.ne.s32.totalorder %s95, %s98
    %p104 = scmp.eq.s32.totalorder %s12, 0
    %p105 = por %p103, %p104
    %p106 = scmp.ne.s32.totalorder %s95, %s98
    %p107 = scmp.eq.s32.totalorder %s17, 1
    %p108 = por %p106, %p107
    %p109 = scmp.ne.s32.totalorder %s98, %s99
    %p110 = scmp.eq.s32.totalorder %s17, 0
    %p111 = por %p109, %p110
    %p112 = scmp.ne.s32.totalorder %s98, %s99
    %p113 = scmp.eq.s32.totalorder %s18, 1
    %p114 = por %p112, %p113
    %p116 = scmp.ne.s32.totalorder %s99, %s115
    %p117 = scmp.eq.s32.totalorder %s18, 0
    %p118 = por %p116, %p117
    %s120 = sadd.s32 %s119, 1
    %p123 = scmp.eq.s32.totalorder %s12, 1
    %p124 = scmp.ne.s32.totalorder %s119, %s121
    %p125 = scmp.eq.s32.totalorder %s12, 0
    %p126 = por %p124, %p125
    %p127 = scmp.ne.s32.totalorder %s119, %s121
    %p128 = scmp.eq.s32.totalorder %s17, 1
    %p129 = por %p127, %p128
    %p130 = scmp.ne.s32.totalorder %s121, %s122
    %p131 = scmp.eq.s32.totalorder %s17, 0
    %p132 = por %p130, %p131
    %p133 = scmp.ne.s32.totalorder %s121, %s122
    %p134 = scmp.eq.s32.totalorder %s18, 1
    %p135 = por %p133, %p134
    %p137 = scmp.ne.s32.totalorder %s122, %s136
    %p138 = scmp.eq.s32.totalorder %s18, 0
    %p139 = por %p137, %p138
    %s141 = sadd.s32 %s140, 1
    %p144 = scmp.eq.s32.totalorder %s12, 1
    %p145 = scmp.ne.s32.totalorder %s140, %s142
    %p146 = scmp.eq.s32.totalorder %s12, 0
    %p147 = por %p145, %p146
    %p148 = scmp.ne.s32.totalorder %s140, %s142
    %p149 = scmp.eq.s32.totalorder %s17, 1
    %p150 = por %p148, %p149
    %p151 = scmp.ne.s32.totalorder %s142, %s143
    %p152 = scmp.eq.s32.totalorder %s17, 0
    %p153 = por %p151, %p152
    %p154 = scmp.ne.s32.totalorder %s142, %s143
    %p155 = scmp.eq.s32.totalorder %s18, 1
    %p156 = por %p154, %p155
    %p158 = scmp.ne.s32.totalorder %s143, %s157
    %p159 = scmp.eq.s32.totalorder %s18, 0
    %p160 = por %p158, %p159
    %s161 = ssub.s32 %s12, %s19
    %p162 = scmp.eq.s32.totalorder %s161, 0
    %s164 = sadd.s32 %s163, 1
    %s165 = scalar_select %p162, %s163, %s164
    %p168 = pneg %p162
    %p169 = scmp.eq.s32.totalorder %s12, 1
    %p170 = por %p168, %p169
    %p171 = scmp.ne.s32.totalorder %s163, %s166
    %p172 = scmp.eq.s32.totalorder %s12, 0
    %p173 = por %p171, %p172
    %p174 = scmp.ne.s32.totalorder %s163, %s166
    %p175 = scmp.eq.s32.totalorder %s17, 1
    %p176 = por %p174, %p175
    %p177 = scmp.ne.s32.totalorder %s166, %s167
    %p178 = scmp.eq.s32.totalorder %s17, 0
    %p179 = por %p177, %p178
    %p180 = scmp.ne.s32.totalorder %s166, %s167
    %p181 = scmp.eq.s32.totalorder %s18, 1
    %p182 = por %p180, %p181
    %p184 = scmp.ne.s32.totalorder %s167, %s183
    %p185 = scmp.eq.s32.totalorder %s18, 0
    %p186 = por %p184, %p185
    %p187 = scmp.le.s32.totalorder 1, %s12
    %p188 = scmp.lt.s32.totalorder %s12, 3
    %p189 = pnand %p187, %p188
    %p190 = pneg %p189
    // Predicated region
    $region9: #{graphsage_forward.1} parent=5 // pred_check
      _
    $region10: #{graphsage_forward.1} parent=5 // pred_check_branch
      %192 = sbr.rel (%p189) target = $region12
    $region11: #{graphsage_forward.1} parent=5 // pred_region
      %s193 = ssub.s32 %s12, 1
      // Predicated region
      $region13: #{graphsage_forward.1} parent=11 // pred_check
        %p194 = pneg %p59
      $region14: #{graphsage_forward.1} parent=11 // pred_check_branch
        %196 = sbr.rel (%p194) target = $region16
      $region15: #{graphsage_forward.1} parent=11 // pred_region
        _
      $region16: #{graphsage_forward.1} parent=11 // pred_fallthru
        _
      // Predicated region
      $region17: #{graphsage_forward.1} parent=11 // pred_check
        %p197 = pneg %p132
      $region18: #{graphsage_forward.1} parent=11 // pred_check_branch
        %199 = sbr.rel (%p197) target = $region20
      $region19: #{graphsage_forward.1} parent=11 // pred_region
        _
      $region20: #{graphsage_forward.1} parent=11 // pred_fallthru
        _
      // Predicated region
      $region21: #{graphsage_forward.1} parent=11 // pred_check
        %p200 = pneg %p153
      $region22: #{graphsage_forward.1} parent=11 // pred_check_branch
        %202 = sbr.rel (%p200) target = $region24
      $region23: #{graphsage_forward.1} parent=11 // pred_region
        _
      $region24: #{graphsage_forward.1} parent=11 // pred_fallthru
        _
    $region12: #{graphsage_forward.1} parent=5 // pred_fallthru
      _
    %p203 = scmp.lt.s32.totalorder %s12, 2
    // Predicated region
    $region25: #{graphsage_forward.1} parent=5 // pred_check
      %p204 = pneg %p203
    $region26: #{graphsage_forward.1} parent=5 // pred_check_branch
      %206 = sbr.rel (%p204) target = $region28
    $region27: #{graphsage_forward.1} parent=5 // pred_region
      // Predicated region
      $region29: #{graphsage_forward.1} parent=27 // pred_check
        %p207 = pneg %p32
      $region30: #{graphsage_forward.1} parent=27 // pred_check_branch
        %209 = sbr.rel (%p207) target = $region32
      $region31: #{graphsage_forward.1} parent=27 // pred_region
        %s210 = smul.u32 16, %s12
        %p211 = scmp.lt.s32.totalorder %s210, 31
        %s212 = scalar_select %p211, %s210, 31
        %s213 = smul.addr %s212, 4
        %s214 = smul.addr %s213, 4
        %s215 = scalar_lea.vmem %s0, %s214
        %s216 = smul.u32 16, %s12
      $region32: #{graphsage_forward.1} parent=27 // pred_fallthru
        _
      // Predicated region
      $region33: #{graphsage_forward.1} parent=27 // pred_check
        %p217 = pneg %p79
      $region34: #{graphsage_forward.1} parent=27 // pred_check_branch
        %219 = sbr.rel (%p217) target = $region36
      $region35: #{graphsage_forward.1} parent=27 // pred_region
        %s220 = smul.u32 16, %s12
        %p221 = scmp.lt.s32.totalorder %s220, 31
        %s222 = scalar_select %p221, %s220, 31
        %s223 = smul.addr %s222, 4
        %s224 = scalar_lea.vmem %s2, %s223
        %s225 = smul.u32 16, %s12
      $region36: #{graphsage_forward.1} parent=27 // pred_fallthru
        _
      // Predicated region
      $region37: #{graphsage_forward.1} parent=27 // pred_check
        %p226 = pneg %p105
      $region38: #{graphsage_forward.1} parent=27 // pred_check_branch
        %228 = sbr.rel (%p226) target = $region40
      $region39: #{graphsage_forward.1} parent=27 // pred_region
        %s229 = smul.u32 16, %s12
        %p230 = scmp.lt.s32.totalorder %s229, 31
        %s231 = scalar_select %p230, %s229, 31
        %s232 = smul.addr %s231, 8
        %s233 = scalar_lea.vmem %s3, %s232
        %s234 = smul.u32 16, %s12
      $region40: #{graphsage_forward.1} parent=27 // pred_fallthru
        _
    $region28: #{graphsage_forward.1} parent=5 // pred_fallthru
      _
    %p235 = scmp.le.s32.totalorder 1, %s12
    %p236 = scmp.lt.s32.totalorder %s12, 3
    %p237 = pnand %p235, %p236
    %p238 = pneg %p237
    // Predicated region
    $region41: #{graphsage_forward.1} parent=5 // pred_check
      _
    $region42: #{graphsage_forward.1} parent=5 // pred_check_branch
      %240 = sbr.rel (%p237) target = $region44
    $region43: #{graphsage_forward.1} parent=5 // pred_region
      %s241 = ssub.s32 %s12, 1
      %s242 = smul.u32 16, %s17
      %p243 = scmp.lt.s32.totalorder %s242, 31
      %s244 = scalar_select %p243, %s242, 31
      %s245 = smul.addr %s244, 4
      %s246 = smul.addr %s245, 4
      %s247 = scalar_lea.vmem %s0, %s246
      %p248 = pneg %p38
      %p249 = pneg %p35
      %p250 = pneg %p59
      %p251 = pneg %p56
      %s252 = smul.u32 16, %s17
      %p253 = scmp.lt.s32.totalorder %s252, 31
      %s254 = scalar_select %p253, %s252, 31
      %s255 = smul.addr %s254, 4
      %s256 = scalar_lea.vmem %s2, %s255
      %p257 = pneg %p85
      %p258 = pneg %p82
      %s259 = smul.u32 16, %s17
      %p260 = scmp.lt.s32.totalorder %s259, 31
      %s261 = scalar_select %p260, %s259, 31
      %s262 = smul.addr %s261, 8
      %s263 = scalar_lea.vmem %s3, %s262
      %p264 = pneg %p111
      %p265 = pneg %p108
      %p266 = pneg %p132
      %p267 = pneg %p129
      %p268 = pneg %p153
      %p269 = pneg %p150
      %p270 = pneg %p179
      %p271 = pneg %p176
      %s272 = smul.u32 16, %s17
      %p273 = scmp.lt.s32.totalorder %s272, 31
      %s274 = scalar_select %p273, %s272, 31
      %s275 = smul.addr %s274, 8
      %s276 = scalar_lea.vmem %s6, %s275
      %s277 = smul.u32 16, %s17
      %p278 = scmp.lt.s32.totalorder %s277, 31
      %s279 = scalar_select %p278, %s277, 31
      %s280 = smul.addr %s279, 4
      %s281 = smul.addr %s280, 4
      %s282 = scalar_lea.vmem %s0, %s281
      %s283 = smul.u32 16, %s17
      %s284 = smul.u32 16, %s17
      %p285 = scmp.lt.s32.totalorder %s284, 31
      %s286 = scalar_select %p285, %s284, 31
      %s287 = smul.addr %s286, 4
      %s288 = scalar_lea.vmem %s2, %s287
      %s289 = smul.u32 16, %s17
      %s290 = smul.u32 16, %s17
      %p291 = scmp.lt.s32.totalorder %s290, 31
      %s292 = scalar_select %p291, %s290, 31
      %s293 = smul.addr %s292, 8
      %s294 = scalar_lea.vmem %s3, %s293
      %s295 = smul.u32 16, %s17
      %s296 = smul.u32 16, %s17
      %p297 = scmp.lt.s32.totalorder %s296, 31
      %s298 = scalar_select %p297, %s296, 31
      %s299 = smul.addr %s298, 8
      %s300 = scalar_lea.vmem %s6, %s299
      %s301 = smul.u32 16, %s17
      %v303 = vld [vmem:[%s282] sm:$0xff]
      %v304 = vld [vmem:[%s282 + $0x8] sm:$0xff]
      %v305 = vld [vmem:[%s282 + $0x10] sm:$0xff]
      %v306 = vld [vmem:[%s282 + $0x18] sm:$0xff]
      %v307 = vld [vmem:[%s282 + $0x20] sm:$0xff]
      %v308 = vld [vmem:[%s282 + $0x28] sm:$0xff]
      %v309 = vld [vmem:[%s282 + $0x30] sm:$0xff]
      %v310 = vld [vmem:[%s282 + $0x38] sm:$0xff]
      %v311 = vld [vmem:[%s282 + $0x40] sm:$0xff]
      %v312 = vld [vmem:[%s282 + $0x48] sm:$0xff]
      %v313 = vld [vmem:[%s282 + $0x50] sm:$0xff]
      %v314 = vld [vmem:[%s282 + $0x58] sm:$0xff]
      %v315 = vld [vmem:[%s282 + $0x60] sm:$0xff]
      %v316 = vld [vmem:[%s282 + $0x68] sm:$0xff]
      %v317 = vld [vmem:[%s282 + $0x70] sm:$0xff]
      %v318 = vld [vmem:[%s282 + $0x78] sm:$0xff]
      %v319 = vld [vmem:[%s282 + $0x80] sm:$0xff]
      %v320 = vld [vmem:[%s282 + $0x88] sm:$0xff]
      %v321 = vld [vmem:[%s282 + $0x90] sm:$0xff]
      %v322 = vld [vmem:[%s282 + $0x98] sm:$0xff]
      %v323 = vld [vmem:[%s282 + $0xa0] sm:$0xff]
      %v324 = vld [vmem:[%s282 + $0xa8] sm:$0xff]
      %v325 = vld [vmem:[%s282 + $0xb0] sm:$0xff]
      %v326 = vld [vmem:[%s282 + $0xb8] sm:$0xff]
      %v327 = vld [vmem:[%s282 + $0xc0] sm:$0xff]
      %v328 = vld [vmem:[%s282 + $0xc8] sm:$0xff]
      %v329 = vld [vmem:[%s282 + $0xd0] sm:$0xff]
      %v330 = vld [vmem:[%s282 + $0xd8] sm:$0xff]
      %v331 = vld [vmem:[%s282 + $0xe0] sm:$0xff]
      %v332 = vld [vmem:[%s282 + $0xe8] sm:$0xff]
      %v333 = vld [vmem:[%s282 + $0xf0] sm:$0xff]
      %v334 = vld [vmem:[%s282 + $0xf8] sm:$0xff]
      %v335 = vld [vmem:[%s1] sm:$0xf]
      %v336 = vld [vmem:[%s1 + $0x4] sm:$0xf]
      %v337 = vld [vmem:[%s1 + $0x8] sm:$0xf]
      %v338 = vld [vmem:[%s1 + $0xc] sm:$0xf]
      %v339 = vld [vmem:[%s1 + $0x10] sm:$0xf]
      %v340 = vld [vmem:[%s1 + $0x14] sm:$0xf]
      %v341 = vld [vmem:[%s1 + $0x18] sm:$0xf]
      %v342 = vld [vmem:[%s1 + $0x1c] sm:$0xf]
      %v343 = vld [vmem:[%s1 + $0x20] sm:$0xf]
      %v344 = vld [vmem:[%s1 + $0x24] sm:$0xf]
      %v345 = vld [vmem:[%s1 + $0x28] sm:$0xf]
      %v346 = vld [vmem:[%s1 + $0x2c] sm:$0xf]
      %v347 = vld [vmem:[%s1 + $0x30] sm:$0xf]
      %v348 = vld [vmem:[%s1 + $0x34] sm:$0xf]
      %v349 = vld [vmem:[%s1 + $0x38] sm:$0xf]
      %v350 = vld [vmem:[%s1 + $0x3c] sm:$0xf]
      %v351 = vld [vmem:[%s1 + $0x40] sm:$0xf]
      %v352 = vld [vmem:[%s1 + $0x44] sm:$0xf]
      %v353 = vld [vmem:[%s1 + $0x48] sm:$0xf]
      %v354 = vld [vmem:[%s1 + $0x4c] sm:$0xf]
      %v355 = vld [vmem:[%s1 + $0x50] sm:$0xf]
      %v356 = vld [vmem:[%s1 + $0x54] sm:$0xf]
      %v357 = vld [vmem:[%s1 + $0x58] sm:$0xf]
      %v358 = vld [vmem:[%s1 + $0x5c] sm:$0xf]
      %v359 = vld [vmem:[%s1 + $0x60] sm:$0xf]
      %v360 = vld [vmem:[%s1 + $0x64] sm:$0xf]
      %v361 = vld [vmem:[%s1 + $0x68] sm:$0xf]
      %v362 = vld [vmem:[%s1 + $0x6c] sm:$0xf]
      %v363 = vld [vmem:[%s1 + $0x70] sm:$0xf]
      %v364 = vld [vmem:[%s1 + $0x74] sm:$0xf]
      %v365 = vld [vmem:[%s1 + $0x78] sm:$0xf]
      %v366 = vld [vmem:[%s1 + $0x7c] sm:$0xf]
      %v367 = vld [vmem:[%s1 + $0x80] sm:$0xf]
      %v368 = vld [vmem:[%s1 + $0x84] sm:$0xf]
      %v369 = vld [vmem:[%s1 + $0x88] sm:$0xf]
      %v370 = vld [vmem:[%s1 + $0x8c] sm:$0xf]
      %v371 = vld [vmem:[%s1 + $0x90] sm:$0xf]
      %v372 = vld [vmem:[%s1 + $0x94] sm:$0xf]
      %v373 = vld [vmem:[%s1 + $0x98] sm:$0xf]
      %v374 = vld [vmem:[%s1 + $0x9c] sm:$0xf]
      %v375 = vld [vmem:[%s1 + $0xa0] sm:$0xf]
      %v376 = vld [vmem:[%s1 + $0xa4] sm:$0xf]
      %v377 = vld [vmem:[%s1 + $0xa8] sm:$0xf]
      %v378 = vld [vmem:[%s1 + $0xac] sm:$0xf]
      %v379 = vld [vmem:[%s1 + $0xb0] sm:$0xf]
      %v380 = vld [vmem:[%s1 + $0xb4] sm:$0xf]
      %v381 = vld [vmem:[%s1 + $0xb8] sm:$0xf]
      %v382 = vld [vmem:[%s1 + $0xbc] sm:$0xf]
      %v383 = vld [vmem:[%s1 + $0xc0] sm:$0xf]
      %v384 = vld [vmem:[%s1 + $0xc4] sm:$0xf]
      %v385 = vld [vmem:[%s1 + $0xc8] sm:$0xf]
      %v386 = vld [vmem:[%s1 + $0xcc] sm:$0xf]
      %v387 = vld [vmem:[%s1 + $0xd0] sm:$0xf]
      %v388 = vld [vmem:[%s1 + $0xd4] sm:$0xf]
      %v389 = vld [vmem:[%s1 + $0xd8] sm:$0xf]
      %v390 = vld [vmem:[%s1 + $0xdc] sm:$0xf]
      %v391 = vld [vmem:[%s1 + $0xe0] sm:$0xf]
      %v392 = vld [vmem:[%s1 + $0xe4] sm:$0xf]
      %v393 = vld [vmem:[%s1 + $0xe8] sm:$0xf]
      %v394 = vld [vmem:[%s1 + $0xec] sm:$0xf]
      %v395 = vld [vmem:[%s1 + $0xf0] sm:$0xf]
      %v396 = vld [vmem:[%s1 + $0xf4] sm:$0xf]
      %v397 = vld [vmem:[%s1 + $0xf8] sm:$0xf]
      %v398 = vld [vmem:[%s1 + $0xfc] sm:$0xf]
      %v431 = vunpack.c.l.b16 %v303
      %v432 = vunpack.c.h.b16 %v303
      %v433 = vunpack.c.l.b16 %v304
      %v434 = vunpack.c.h.b16 %v304
      %v435 = vunpack.c.l.b16 %v305
      %v436 = vunpack.c.h.b16 %v305
      %v437 = vunpack.c.l.b16 %v306
      %v438 = vunpack.c.h.b16 %v306
      %v439 = vunpack.c.l.b16 %v307
      %v440 = vunpack.c.h.b16 %v307
      %v441 = vunpack.c.l.b16 %v308
      %v442 = vunpack.c.h.b16 %v308
      %v443 = vunpack.c.l.b16 %v309
      %v444 = vunpack.c.h.b16 %v309
      %v445 = vunpack.c.l.b16 %v310
      %v446 = vunpack.c.h.b16 %v310
      %v447 = vunpack.c.l.b16 %v311
      %v448 = vunpack.c.h.b16 %v311
      %v449 = vunpack.c.l.b16 %v312
      %v450 = vunpack.c.h.b16 %v312
      %v451 = vunpack.c.l.b16 %v313
      %v452 = vunpack.c.h.b16 %v313
      %v453 = vunpack.c.l.b16 %v314
      %v454 = vunpack.c.h.b16 %v314
      %v455 = vunpack.c.l.b16 %v315
      %v456 = vunpack.c.h.b16 %v315
      %v457 = vunpack.c.l.b16 %v316
      %v458 = vunpack.c.h.b16 %v316
      %v459 = vunpack.c.l.b16 %v317
      %v460 = vunpack.c.h.b16 %v317
      %v461 = vunpack.c.l.b16 %v318
      %v462 = vunpack.c.h.b16 %v318
      %v463 = vunpack.c.l.b16 %v319
      %v464 = vunpack.c.h.b16 %v319
      %v465 = vunpack.c.l.b16 %v320
      %v466 = vunpack.c.h.b16 %v320
      %v467 = vunpack.c.l.b16 %v321
      %v468 = vunpack.c.h.b16 %v321
      %v469 = vunpack.c.l.b16 %v322
      %v470 = vunpack.c.h.b16 %v322
      %v471 = vunpack.c.l.b16 %v323
      %v472 = vunpack.c.h.b16 %v323
      %v473 = vunpack.c.l.b16 %v324
      %v474 = vunpack.c.h.b16 %v324
      %v475 = vunpack.c.l.b16 %v325
      %v476 = vunpack.c.h.b16 %v325
      %v477 = vunpack.c.l.b16 %v326
      %v478 = vunpack.c.h.b16 %v326
      %v479 = vunpack.c.l.b16 %v327
      %v480 = vunpack.c.h.b16 %v327
      %v481 = vunpack.c.l.b16 %v328
      %v482 = vunpack.c.h.b16 %v328
      %v483 = vunpack.c.l.b16 %v329
      %v484 = vunpack.c.h.b16 %v329
      %v485 = vunpack.c.l.b16 %v330
      %v486 = vunpack.c.h.b16 %v330
      %v487 = vunpack.c.l.b16 %v331
      %v488 = vunpack.c.h.b16 %v331
      %v489 = vunpack.c.l.b16 %v332
      %v490 = vunpack.c.h.b16 %v332
      %v491 = vunpack.c.l.b16 %v333
      %v492 = vunpack.c.h.b16 %v333
      %v493 = vunpack.c.l.b16 %v334
      %v494 = vunpack.c.h.b16 %v334
      %v495 = vpack.c.b16 %v435, %v431
      %v496 = vpack.c.b16 %v436, %v432
      %v497 = vpack.c.b16 %v437, %v433
      %v498 = vpack.c.b16 %v438, %v434
      %v499 = vpack.c.b16 %v443, %v439
      %v500 = vpack.c.b16 %v444, %v440
      %v501 = vpack.c.b16 %v445, %v441
      %v502 = vpack.c.b16 %v446, %v442
      %v503 = vpack.c.b16 %v451, %v447
      %v504 = vpack.c.b16 %v452, %v448
      %v505 = vpack.c.b16 %v453, %v449
      %v506 = vpack.c.b16 %v454, %v450
      %v507 = vpack.c.b16 %v459, %v455
      %v508 = vpack.c.b16 %v460, %v456
      %v509 = vpack.c.b16 %v461, %v457
      %v510 = vpack.c.b16 %v462, %v458
      %v511 = vpack.c.b16 %v467, %v463
      %v512 = vpack.c.b16 %v468, %v464
      %v513 = vpack.c.b16 %v469, %v465
      %v514 = vpack.c.b16 %v470, %v466
      %v515 = vpack.c.b16 %v475, %v471
      %v516 = vpack.c.b16 %v476, %v472
      %v517 = vpack.c.b16 %v477, %v473
      %v518 = vpack.c.b16 %v478, %v474
      %v519 = vpack.c.b16 %v483, %v479
      %v520 = vpack.c.b16 %v484, %v480
      %v521 = vpack.c.b16 %v485, %v481
      %v522 = vpack.c.b16 %v486, %v482
      %v523 = vpack.c.b16 %v491, %v487
      %v524 = vpack.c.b16 %v492, %v488
      %v525 = vpack.c.b16 %v493, %v489
      %v526 = vpack.c.b16 %v494, %v490
      %v623 = vunpack.c.l.b16 %v335
      %v624 = vunpack.c.l.b16 %v336
      %v625 = vunpack.c.l.b16 %v337
      %v626 = vunpack.c.l.b16 %v338
      %v627 = vunpack.c.l.b16 %v339
      %v628 = vunpack.c.l.b16 %v340
      %v629 = vunpack.c.l.b16 %v341
      %v630 = vunpack.c.l.b16 %v342
      %v631 = vunpack.c.l.b16 %v343
      %v632 = vunpack.c.l.b16 %v344
      %v633 = vunpack.c.l.b16 %v345
      %v634 = vunpack.c.l.b16 %v346
      %v635 = vunpack.c.l.b16 %v347
      %v636 = vunpack.c.l.b16 %v348
      %v637 = vunpack.c.l.b16 %v349
      %v638 = vunpack.c.l.b16 %v350
      %v639 = vunpack.c.l.b16 %v351
      %v640 = vunpack.c.l.b16 %v352
      %v641 = vunpack.c.l.b16 %v353
      %v642 = vunpack.c.l.b16 %v354
      %v643 = vunpack.c.l.b16 %v355
      %v644 = vunpack.c.l.b16 %v356
      %v645 = vunpack.c.l.b16 %v357
      %v646 = vunpack.c.l.b16 %v358
      %v647 = vunpack.c.l.b16 %v359
      %v648 = vunpack.c.l.b16 %v360
      %v649 = vunpack.c.l.b16 %v361
      %v650 = vunpack.c.l.b16 %v362
      %v651 = vunpack.c.l.b16 %v363
      %v652 = vunpack.c.l.b16 %v364
      %v653 = vunpack.c.l.b16 %v365
      %v654 = vunpack.c.l.b16 %v366
      %v655 = vunpack.c.l.b16 %v367
      %v656 = vunpack.c.l.b16 %v368
      %v657 = vunpack.c.l.b16 %v369
      %v658 = vunpack.c.l.b16 %v370
      %v659 = vunpack.c.l.b16 %v371
      %v660 = vunpack.c.l.b16 %v372
      %v661 = vunpack.c.l.b16 %v373
      %v662 = vunpack.c.l.b16 %v374
      %v663 = vunpack.c.l.b16 %v375
      %v664 = vunpack.c.l.b16 %v376
      %v665 = vunpack.c.l.b16 %v377
      %v666 = vunpack.c.l.b16 %v378
      %v667 = vunpack.c.l.b16 %v379
      %v668 = vunpack.c.l.b16 %v380
      %v669 = vunpack.c.l.b16 %v381
      %v670 = vunpack.c.l.b16 %v382
      %v671 = vunpack.c.l.b16 %v383
      %v672 = vunpack.c.l.b16 %v384
      %v673 = vunpack.c.l.b16 %v385
      %v674 = vunpack.c.l.b16 %v386
      %v675 = vunpack.c.l.b16 %v387
      %v676 = vunpack.c.l.b16 %v388
      %v677 = vunpack.c.l.b16 %v389
      %v678 = vunpack.c.l.b16 %v390
      %v679 = vunpack.c.l.b16 %v391
      %v680 = vunpack.c.l.b16 %v392
      %v681 = vunpack.c.l.b16 %v393
      %v682 = vunpack.c.l.b16 %v394
      %v683 = vunpack.c.l.b16 %v395
      %v684 = vunpack.c.l.b16 %v396
      %v685 = vunpack.c.l.b16 %v397
      %v686 = vunpack.c.l.b16 %v398
      %v687 = vpack.c.b16 %v624, %v623
      %v688 = vpack.c.b16 %v626, %v625
      %v689 = vpack.c.b16 %v628, %v627
      %v690 = vpack.c.b16 %v630, %v629
      %v691 = vpack.c.b16 %v632, %v631
      %v692 = vpack.c.b16 %v634, %v633
      %v693 = vpack.c.b16 %v636, %v635
      %v694 = vpack.c.b16 %v638, %v637
      %v695 = vpack.c.b16 %v640, %v639
      %v696 = vpack.c.b16 %v642, %v641
      %v697 = vpack.c.b16 %v644, %v643
      %v698 = vpack.c.b16 %v646, %v645
      %v699 = vpack.c.b16 %v648, %v647
      %v700 = vpack.c.b16 %v650, %v649
      %v701 = vpack.c.b16 %v652, %v651
      %v702 = vpack.c.b16 %v654, %v653
      %v703 = vpack.c.b16 %v656, %v655
      %v704 = vpack.c.b16 %v658, %v657
      %v705 = vpack.c.b16 %v660, %v659
      %v706 = vpack.c.b16 %v662, %v661
      %v707 = vpack.c.b16 %v664, %v663
      %v708 = vpack.c.b16 %v666, %v665
      %v709 = vpack.c.b16 %v668, %v667
      %v710 = vpack.c.b16 %v670, %v669
      %v711 = vpack.c.b16 %v672, %v671
      %v712 = vpack.c.b16 %v674, %v673
      %v713 = vpack.c.b16 %v676, %v675
      %v714 = vpack.c.b16 %v678, %v677
      %v715 = vpack.c.b16 %v680, %v679
      %v716 = vpack.c.b16 %v682, %v681
      %v717 = vpack.c.b16 %v684, %v683
      %v718 = vpack.c.b16 %v686, %v685
      %751 = vmatprep.subr.bf16.mxu0 0
      %752 = vmatpush1.bf16.msra.mxu0 %v687
      %753 = vmatprep.subr.bf16.mxu0 0
      %754 = vmatpush1.bf16.msra.mxu0 %v688
      %755 = vmatprep.subr.bf16.mxu0 0
      %756 = vmatpush1.bf16.msra.mxu0 %v689
      %757 = vmatprep.subr.bf16.mxu0 0
      %758 = vmatpush1.bf16.msra.mxu0 %v690
      %759 = vmatprep.subr.bf16.mxu0 0
      %760 = vmatpush1.bf16.msra.mxu0 %v691
      %761 = vmatprep.subr.bf16.mxu0 0
      %762 = vmatpush1.bf16.msra.mxu0 %v692
      %763 = vmatprep.subr.bf16.mxu0 0
      %764 = vmatpush1.bf16.msra.mxu0 %v693
      %765 = vmatprep.subr.bf16.mxu0 0
      %766 = vmatpush1.bf16.msra.mxu0 %v694
      %767 = vmatprep.subr.bf16.mxu0 0
      %768 = vmatpush1.bf16.msra.mxu0 %v695
      %769 = vmatprep.subr.bf16.mxu0 0
      %770 = vmatpush1.bf16.msra.mxu0 %v696
      %771 = vmatprep.subr.bf16.mxu0 0
      %772 = vmatpush1.bf16.msra.mxu0 %v697
      %773 = vmatprep.subr.bf16.mxu0 0
      %774 = vmatpush1.bf16.msra.mxu0 %v698
      %775 = vmatprep.subr.bf16.mxu0 0
      %776 = vmatpush1.bf16.msra.mxu0 %v699
      %777 = vmatprep.subr.bf16.mxu0 0
      %778 = vmatpush1.bf16.msra.mxu0 %v700
      %779 = vmatprep.subr.bf16.mxu0 0
      %780 = vmatpush1.bf16.msra.mxu0 %v701
      %781 = vmatprep.subr.bf16.mxu0 0
      %782 = vmatpush1.bf16.msra.mxu0 %v702
      %783 = vmatprep.mubr.bf16.mxu0 %v496
      %784 = vmatmul.mubr.bf16.gmra.mrb[0].mxu0 %v495
      %v785 = vpop.f32.mrb[0].mxu0
      %v786 = vadd.f32 0.0, %v785
      %v787 = vpop.f32.mrb[0].mxu0
      %v788 = vpop.f32.mrb[0].mxu0
      %v789 = vadd.f32 0.0, %v788
      %v790 = vpop.f32.mrb[0].mxu0
      %791 = vmatprep.mubr.bf16.mxu0 %v500
      %792 = vmatmul.mubr.bf16.gmra.mrb[0].mxu0 %v499
      %v793 = vpop.f32.mrb[0].mxu0
      %v794 = vadd.f32 0.0, %v793
      %v795 = vpop.f32.mrb[0].mxu0
      %v796 = vpop.f32.mrb[0].mxu0
      %v797 = vadd.f32 0.0, %v796
      %v798 = vpop.f32.mrb[0].mxu0
      %799 = vmatprep.mubr.bf16.mxu0 %v504
      %800 = vmatmul.mubr.bf16.gmra.mrb[0].mxu0 %v503
      %v801 = vpop.f32.mrb[0].mxu0
      %v802 = vadd.f32 0.0, %v801
      %v803 = vpop.f32.mrb[0].mxu0
      %v804 = vpop.f32.mrb[0].mxu0
      %v805 = vadd.f32 0.0, %v804
      %v806 = vpop.f32.mrb[0].mxu0
      %807 = vmatprep.mubr.bf16.mxu0 %v508
      %808 = vmatmul.mubr.bf16.gmra.mrb[0].mxu0 %v507
      %v809 = vpop.f32.mrb[0].mxu0
      %v810 = vadd.f32 0.0, %v809
      %v811 = vpop.f32.mrb[0].mxu0
      %v812 = vpop.f32.mrb[0].mxu0
      %v813 = vadd.f32 0.0, %v812
      %v814 = vpop.f32.mrb[0].mxu0
      %815 = vmatprep.mubr.bf16.mxu0 %v512
      %816 = vmatmul.mubr.bf16.gmra.mrb[0].mxu0 %v511
      %v817 = vpop.f32.mrb[0].mxu0
      %v818 = vadd.f32 0.0, %v817
      %v819 = vpop.f32.mrb[0].mxu0
      %v820 = vpop.f32.mrb[0].mxu0
      %v821 = vadd.f32 0.0, %v820
      %v822 = vpop.f32.mrb[0].mxu0
      %823 = vmatprep.mubr.bf16.mxu0 %v516
      %824 = vmatmul.mubr.bf16.gmra.mrb[0].mxu0 %v515
      %v825 = vpop.f32.mrb[0].mxu0
      %v826 = vadd.f32 0.0, %v825
      %v827 = vpop.f32.mrb[0].mxu0
      %v828 = vpop.f32.mrb[0].mxu0
      %v829 = vadd.f32 0.0, %v828
      %v830 = vpop.f32.mrb[0].mxu0
      %831 = vmatprep.mubr.bf16.mxu0 %v520
      %832 = vmatmul.mubr.bf16.gmra.mrb[0].mxu0 %v519
      %v833 = vpop.f32.mrb[0].mxu0
      %v834 = vadd.f32 0.0, %v833
      %v835 = vpop.f32.mrb[0].mxu0
      %v836 = vpop.f32.mrb[0].mxu0
      %v837 = vadd.f32 0.0, %v836
      %v838 = vpop.f32.mrb[0].mxu0
      %839 = vmatprep.mubr.bf16.mxu0 %v524
      %840 = vmatmul.mubr.bf16.gmra.mrb[0].mxu0 %v523
      %v841 = vpop.f32.mrb[0].mxu0
      %v842 = vadd.f32 0.0, %v841
      %v843 = vpop.f32.mrb[0].mxu0
      %v844 = vpop.f32.mrb[0].mxu0
      %v845 = vadd.f32 0.0, %v844
      %v846 = vpop.f32.mrb[0].mxu0
      %847 = vdwg.mxu0
      %848 = vmatprep.subr.bf16.mxu0 0
      %849 = vmatpush1.bf16.msra.mxu0 %v703
      %850 = vmatprep.subr.bf16.mxu0 0
      %851 = vmatpush1.bf16.msra.mxu0 %v704
      %852 = vmatprep.subr.bf16.mxu0 0
      %853 = vmatpush1.bf16.msra.mxu0 %v705
      %854 = vmatprep.subr.bf16.mxu0 0
      %855 = vmatpush1.bf16.msra.mxu0 %v706
      %856 = vmatprep.subr.bf16.mxu0 0
      %857 = vmatpush1.bf16.msra.mxu0 %v707
      %858 = vmatprep.subr.bf16.mxu0 0
      %859 = vmatpush1.bf16.msra.mxu0 %v708
      %860 = vmatprep.subr.bf16.mxu0 0
      %861 = vmatpush1.bf16.msra.mxu0 %v709
      %862 = vmatprep.subr.bf16.mxu0 0
      %863 = vmatpush1.bf16.msra.mxu0 %v710
      %864 = vmatprep.subr.bf16.mxu0 0
      %865 = vmatpush1.bf16.msra.mxu0 %v711
      %866 = vmatprep.subr.bf16.mxu0 0
      %867 = vmatpush1.bf16.msra.mxu0 %v712
      %868 = vmatprep.subr.bf16.mxu0 0
      %869 = vmatpush1.bf16.msra.mxu0 %v713
      %870 = vmatprep.subr.bf16.mxu0 0
      %871 = vmatpush1.bf16.msra.mxu0 %v714
      %872 = vmatprep.subr.bf16.mxu0 0
      %873 = vmatpush1.bf16.msra.mxu0 %v715
      %874 = vmatprep.subr.bf16.mxu0 0
      %875 = vmatpush1.bf16.msra.mxu0 %v716
      %876 = vmatprep.subr.bf16.mxu0 0
      %877 = vmatpush1.bf16.msra.mxu0 %v717
      %878 = vmatprep.subr.bf16.mxu0 0
      %879 = vmatpush1.bf16.msra.mxu0 %v718
      %880 = vmatprep.mubr.bf16.mxu0 %v498
      %881 = vmatmul.mubr.bf16.gmra.mrb[0].mxu0 %v497
      %v882 = vpop.f32.mrb[0].mxu0
      %v883 = vadd.f32 %v786, %v882
      %v884 = vpop.f32.mrb[0].mxu0
      %v885 = vpop.f32.mrb[0].mxu0
      %v886 = vadd.f32 %v789, %v885
      %v887 = vpop.f32.mrb[0].mxu0
      %888 = vmatprep.mubr.bf16.mxu0 %v502
      %889 = vmatmul.mubr.bf16.gmra.mrb[0].mxu0 %v501
      %v890 = vpop.f32.mrb[0].mxu0
      %v891 = vadd.f32 %v794, %v890
      %v892 = vpop.f32.mrb[0].mxu0
      %v893 = vpop.f32.mrb[0].mxu0
      %v894 = vadd.f32 %v797, %v893
      %v895 = vpop.f32.mrb[0].mxu0
      %896 = vmatprep.mubr.bf16.mxu0 %v506
      %897 = vmatmul.mubr.bf16.gmra.mrb[0].mxu0 %v505
      %v898 = vpop.f32.mrb[0].mxu0
      %v899 = vadd.f32 %v802, %v898
      %v900 = vpop.f32.mrb[0].mxu0
      %v901 = vpop.f32.mrb[0].mxu0
      %v902 = vadd.f32 %v805, %v901
      %v903 = vpop.f32.mrb[0].mxu0
      %904 = vmatprep.mubr.bf16.mxu0 %v510
      %905 = vmatmul.mubr.bf16.gmra.mrb[0].mxu0 %v509
      %v906 = vpop.f32.mrb[0].mxu0
      %v907 = vadd.f32 %v810, %v906
      %v908 = vpop.f32.mrb[0].mxu0
      %v909 = vpop.f32.mrb[0].mxu0
      %v910 = vadd.f32 %v813, %v909
      %v911 = vpop.f32.mrb[0].mxu0
      %912 = vmatprep.mubr.bf16.mxu0 %v514
      %913 = vmatmul.mubr.bf16.gmra.mrb[0].mxu0 %v513
      %v914 = vpop.f32.mrb[0].mxu0
      %v915 = vadd.f32 %v818, %v914
      %v916 = vpop.f32.mrb[0].mxu0
      %v917 = vpop.f32.mrb[0].mxu0
      %v918 = vadd.f32 %v821, %v917
      %v919 = vpop.f32.mrb[0].mxu0
      %920 = vmatprep.mubr.bf16.mxu0 %v518
      %921 = vmatmul.mubr.bf16.gmra.mrb[0].mxu0 %v517
      %v922 = vpop.f32.mrb[0].mxu0
      %v923 = vadd.f32 %v826, %v922
      %v924 = vpop.f32.mrb[0].mxu0
      %v925 = vpop.f32.mrb[0].mxu0
      %v926 = vadd.f32 %v829, %v925
      %v927 = vpop.f32.mrb[0].mxu0
      %928 = vmatprep.mubr.bf16.mxu0 %v522
      %929 = vmatmul.mubr.bf16.gmra.mrb[0].mxu0 %v521
      %v930 = vpop.f32.mrb[0].mxu0
      %v931 = vadd.f32 %v834, %v930
      %v932 = vpop.f32.mrb[0].mxu0
      %v933 = vpop.f32.mrb[0].mxu0
      %v934 = vadd.f32 %v837, %v933
      %v935 = vpop.f32.mrb[0].mxu0
      %936 = vmatprep.mubr.bf16.mxu0 %v526
      %937 = vmatmul.mubr.bf16.gmra.mrb[0].mxu0 %v525
      %v938 = vpop.f32.mrb[0].mxu0
      %v939 = vadd.f32 %v842, %v938
      %v940 = vpop.f32.mrb[0].mxu0
      %v941 = vpop.f32.mrb[0].mxu0
      %v942 = vadd.f32 %v845, %v941
      %v943 = vpop.f32.mrb[0].mxu0
      %944 = vdwg.mxu0
      %v945 = vld [vmem:[%s294] sm:$0xff]
      %v946 = vld [vmem:[%s294 + $0x8] sm:$0xff]
      %v947 = vld [vmem:[%s294 + $0x10] sm:$0xff]
      %v948 = vld [vmem:[%s294 + $0x18] sm:$0xff]
      %v949 = vld [vmem:[%s294 + $0x20] sm:$0xff]
      %v950 = vld [vmem:[%s294 + $0x28] sm:$0xff]
      %v951 = vld [vmem:[%s294 + $0x30] sm:$0xff]
      %v952 = vld [vmem:[%s294 + $0x38] sm:$0xff]
      %v953 = vld [vmem:[%s294 + $0x40] sm:$0xff]
      %v954 = vld [vmem:[%s294 + $0x48] sm:$0xff]
      %v955 = vld [vmem:[%s294 + $0x50] sm:$0xff]
      %v956 = vld [vmem:[%s294 + $0x58] sm:$0xff]
      %v957 = vld [vmem:[%s294 + $0x60] sm:$0xff]
      %v958 = vld [vmem:[%s294 + $0x68] sm:$0xff]
      %v959 = vld [vmem:[%s294 + $0x70] sm:$0xff]
      %v960 = vld [vmem:[%s294 + $0x78] sm:$0xff]
      %962 = vset.pattern.permute.xlu0 0
      %963 = vperm.xlu0 %962, %v945
      %v964 = vpop.permute.xlu0 %963
      %967 = vset.pattern.permute.xlu0 0
      %968 = vperm.xlu0 %967, %v946
      %v969 = vpop.permute.xlu0 %968
      %972 = vset.pattern.permute.xlu0 0
      %973 = vperm.xlu0 %972, %v947
      %v974 = vpop.permute.xlu0 %973
      %977 = vset.pattern.permute.xlu0 0
      %978 = vperm.xlu0 %977, %v948
      %v979 = vpop.permute.xlu0 %978
      %982 = vset.pattern.permute.xlu0 0
      %983 = vperm.xlu0 %982, %v949
      %v984 = vpop.permute.xlu0 %983
      %987 = vset.pattern.permute.xlu0 0
      %988 = vperm.xlu0 %987, %v950
      %v989 = vpop.permute.xlu0 %988
      %992 = vset.pattern.permute.xlu0 0
      %993 = vperm.xlu0 %992, %v951
      %v994 = vpop.permute.xlu0 %993
      %997 = vset.pattern.permute.xlu0 0
      %998 = vperm.xlu0 %997, %v952
      %v999 = vpop.permute.xlu0 %998
      %1002 = vset.pattern.permute.xlu0 0
      %1003 = vperm.xlu0 %1002, %v953
      %v1004 = vpop.permute.xlu0 %1003
      %1007 = vset.pattern.permute.xlu0 0
      %1008 = vperm.xlu0 %1007, %v954
      %v1009 = vpop.permute.xlu0 %1008
      %1012 = vset.pattern.permute.xlu0 0
      %1013 = vperm.xlu0 %1012, %v955
      %v1014 = vpop.permute.xlu0 %1013
      %1017 = vset.pattern.permute.xlu0 0
      %1018 = vperm.xlu0 %1017, %v956
      %v1019 = vpop.permute.xlu0 %1018
      %1022 = vset.pattern.permute.xlu0 0
      %1023 = vperm.xlu0 %1022, %v957
      %v1024 = vpop.permute.xlu0 %1023
      %1027 = vset.pattern.permute.xlu0 0
      %1028 = vperm.xlu0 %1027, %v958
      %v1029 = vpop.permute.xlu0 %1028
      %1032 = vset.pattern.permute.xlu0 0
      %1033 = vperm.xlu0 %1032, %v959
      %v1034 = vpop.permute.xlu0 %1033
      %1037 = vset.pattern.permute.xlu0 0
      %1038 = vperm.xlu0 %1037, %v960
      %v1039 = vpop.permute.xlu0 %1038
      %v1041 = vmul.f32 %v883, %v964
      %v1042 = vmul.f32 %v886, %v969
      %v1043 = vmul.f32 %v891, %v974
      %v1044 = vmul.f32 %v894, %v979
      %v1045 = vmul.f32 %v899, %v984
      %v1046 = vmul.f32 %v902, %v989
      %v1047 = vmul.f32 %v907, %v994
      %v1048 = vmul.f32 %v910, %v999
      %v1049 = vmul.f32 %v915, %v1004
      %v1050 = vmul.f32 %v918, %v1009
      %v1051 = vmul.f32 %v923, %v1014
      %v1052 = vmul.f32 %v926, %v1019
      %v1053 = vmul.f32 %v931, %v1024
      %v1054 = vmul.f32 %v934, %v1029
      %v1055 = vmul.f32 %v939, %v1034
      %v1056 = vmul.f32 %v942, %v1039
      %v1057 = vpack.c.bf16 %v1042, %v1041
      %v1058 = vpack.c.bf16 %v1044, %v1043
      %v1059 = vpack.c.bf16 %v1046, %v1045
      %v1060 = vpack.c.bf16 %v1048, %v1047
      %v1061 = vpack.c.bf16 %v1050, %v1049
      %v1062 = vpack.c.bf16 %v1052, %v1051
      %v1063 = vpack.c.bf16 %v1054, %v1053
      %v1064 = vpack.c.bf16 %v1056, %v1055
      %v1065 = vld [vmem:[%s288] sm:$0xf]
      %v1066 = vld [vmem:[%s288 + $0x4] sm:$0xf]
      %v1067 = vld [vmem:[%s288 + $0x8] sm:$0xf]
      %v1068 = vld [vmem:[%s288 + $0xc] sm:$0xf]
      %v1069 = vld [vmem:[%s288 + $0x10] sm:$0xf]
      %v1070 = vld [vmem:[%s288 + $0x14] sm:$0xf]
      %v1071 = vld [vmem:[%s288 + $0x18] sm:$0xf]
      %v1072 = vld [vmem:[%s288 + $0x1c] sm:$0xf]
      %v1073 = vld [vmem:[%s288 + $0x20] sm:$0xf]
      %v1074 = vld [vmem:[%s288 + $0x24] sm:$0xf]
      %v1075 = vld [vmem:[%s288 + $0x28] sm:$0xf]
      %v1076 = vld [vmem:[%s288 + $0x2c] sm:$0xf]
      %v1077 = vld [vmem:[%s288 + $0x30] sm:$0xf]
      %v1078 = vld [vmem:[%s288 + $0x34] sm:$0xf]
      %v1079 = vld [vmem:[%s288 + $0x38] sm:$0xf]
      %v1080 = vld [vmem:[%s288 + $0x3c] sm:$0xf]
      %v1081 = vld [vmem:[%s4] sm:$0xf]
      %v1082 = vld [vmem:[%s4 + $0x4] sm:$0xf]
      %v1083 = vld [vmem:[%s4 + $0x8] sm:$0xf]
      %v1084 = vld [vmem:[%s4 + $0xc] sm:$0xf]
      %v1085 = vld [vmem:[%s4 + $0x10] sm:$0xf]
      %v1086 = vld [vmem:[%s4 + $0x14] sm:$0xf]
      %v1087 = vld [vmem:[%s4 + $0x18] sm:$0xf]
      %v1088 = vld [vmem:[%s4 + $0x1c] sm:$0xf]
      %v1089 = vld [vmem:[%s4 + $0x20] sm:$0xf]
      %v1090 = vld [vmem:[%s4 + $0x24] sm:$0xf]
      %v1091 = vld [vmem:[%s4 + $0x28] sm:$0xf]
      %v1092 = vld [vmem:[%s4 + $0x2c] sm:$0xf]
      %v1093 = vld [vmem:[%s4 + $0x30] sm:$0xf]
      %v1094 = vld [vmem:[%s4 + $0x34] sm:$0xf]
      %v1095 = vld [vmem:[%s4 + $0x38] sm:$0xf]
      %v1096 = vld [vmem:[%s4 + $0x3c] sm:$0xf]
      %v1097 = vld [vmem:[%s5] sm:$0xf]
      %v1098 = vld [vmem:[%s5 + $0x4] sm:$0xf]
      %v1099 = vld [vmem:[%s5 + $0x8] sm:$0xf]
      %v1100 = vld [vmem:[%s5 + $0xc] sm:$0xf]
      %v1101 = vld [vmem:[%s5 + $0x10] sm:$0xf]
      %v1102 = vld [vmem:[%s5 + $0x14] sm:$0xf]
      %v1103 = vld [vmem:[%s5 + $0x18] sm:$0xf]
      %v1104 = vld [vmem:[%s5 + $0x1c] sm:$0xf]
      %v1105 = vld [vmem:[%s5 + $0x20] sm:$0xf]
      %v1106 = vld [vmem:[%s5 + $0x24] sm:$0xf]
      %v1107 = vld [vmem:[%s5 + $0x28] sm:$0xf]
      %v1108 = vld [vmem:[%s5 + $0x2c] sm:$0xf]
      %v1109 = vld [vmem:[%s5 + $0x30] sm:$0xf]
      %v1110 = vld [vmem:[%s5 + $0x34] sm:$0xf]
      %v1111 = vld [vmem:[%s5 + $0x38] sm:$0xf]
      %v1112 = vld [vmem:[%s5 + $0x3c] sm:$0xf]
      %v1129 = vunpack.c.l.b16 %v1097
      %v1130 = vunpack.c.l.b16 %v1098
      %v1131 = vunpack.c.l.b16 %v1099
      %v1132 = vunpack.c.l.b16 %v1100
      %v1133 = vunpack.c.l.b16 %v1101
      %v1134 = vunpack.c.l.b16 %v1102
      %v1135 = vunpack.c.l.b16 %v1103
      %v1136 = vunpack.c.l.b16 %v1104
      %v1137 = vunpack.c.l.b16 %v1105
      %v1138 = vunpack.c.l.b16 %v1106
      %v1139 = vunpack.c.l.b16 %v1107
      %v1140 = vunpack.c.l.b16 %v1108
      %v1141 = vunpack.c.l.b16 %v1109
      %v1142 = vunpack.c.l.b16 %v1110
      %v1143 = vunpack.c.l.b16 %v1111
      %v1144 = vunpack.c.l.b16 %v1112
      %v1145 = vpack.c.b16 %v1130, %v1129
      %v1146 = vpack.c.b16 %v1132, %v1131
      %v1147 = vpack.c.b16 %v1134, %v1133
      %v1148 = vpack.c.b16 %v1136, %v1135
      %v1149 = vpack.c.b16 %v1138, %v1137
      %v1150 = vpack.c.b16 %v1140, %v1139
      %v1151 = vpack.c.b16 %v1142, %v1141
      %v1152 = vpack.c.b16 %v1144, %v1143
      %1161 = vmatprep.subr.bf16.mxu0 0
      %1162 = vmatpush1.bf16.msra.mxu0 %v1145
      %1163 = vmatprep.subr.bf16.mxu0 0
      %1164 = vmatpush1.bf16.msra.mxu0 %v1146
      %1165 = vmatprep.subr.bf16.mxu0 0
      %1166 = vmatpush1.bf16.msra.mxu0 %v1147
      %1167 = vmatprep.subr.bf16.mxu0 0
      %1168 = vmatpush1.bf16.msra.mxu0 %v1148
      %1169 = vmatprep.subr.bf16.mxu0 0
      %1170 = vmatpush1.bf16.msra.mxu0 %v1149
      %1171 = vmatprep.subr.bf16.mxu0 0
      %1172 = vmatpush1.bf16.msra.mxu0 %v1150
      %1173 = vmatprep.subr.bf16.mxu0 0
      %1174 = vmatpush1.bf16.msra.mxu0 %v1151
      %1175 = vmatprep.subr.bf16.mxu0 0
      %1176 = vmatpush1.bf16.msra.mxu0 %v1152
      %1177 = vmatprep.subr.bf16.mxu0 0
      %1178 = vmatpush1.bf16.msra.mxu0 0
      %1179 = vmatprep.subr.bf16.mxu0 0
      %1180 = vmatpush1.bf16.msra.mxu0 0
      %1181 = vmatprep.subr.bf16.mxu0 0
      %1182 = vmatpush1.bf16.msra.mxu0 0
      %1183 = vmatprep.subr.bf16.mxu0 0
      %1184 = vmatpush1.bf16.msra.mxu0 0
      %1185 = vmatprep.subr.bf16.mxu0 0
      %1186 = vmatpush1.bf16.msra.mxu0 0
      %1187 = vmatprep.subr.bf16.mxu0 0
      %1188 = vmatpush1.bf16.msra.mxu0 0
      %1189 = vmatprep.subr.bf16.mxu0 0
      %1190 = vmatpush1.bf16.msra.mxu0 0
      %1191 = vmatprep.subr.bf16.mxu0 0
      %1192 = vmatpush1.bf16.msra.mxu0 0
      %1193 = vmatprep.mubr.bf16.mxu0 0
      %1194 = vmatmul.mubr.bf16.gmra.mrb[0].mxu0 %v1057
      %v1195 = vpop.f32.mrb[0].mxu0
      %v1196 = vadd.f32 0.0, %v1195
      %v1197 = vpop.f32.mrb[0].mxu0
      %v1198 = vpop.f32.mrb[0].mxu0
      %v1199 = vadd.f32 0.0, %v1198
      %v1200 = vpop.f32.mrb[0].mxu0
      %1201 = vmatprep.mubr.bf16.mxu0 0
      %1202 = vmatmul.mubr.bf16.gmra.mrb[0].mxu0 %v1058
      %v1203 = vpop.f32.mrb[0].mxu0
      %v1204 = vadd.f32 0.0, %v1203
      %v1205 = vpop.f32.mrb[0].mxu0
      %v1206 = vpop.f32.mrb[0].mxu0
      %v1207 = vadd.f32 0.0, %v1206
      %v1208 = vpop.f32.mrb[0].mxu0
      %1209 = vmatprep.mubr.bf16.mxu0 0
      %1210 = vmatmul.mubr.bf16.gmra.mrb[0].mxu0 %v1059
      %v1211 = vpop.f32.mrb[0].mxu0
      %v1212 = vadd.f32 0.0, %v1211
      %v1213 = vpop.f32.mrb[0].mxu0
      %v1214 = vpop.f32.mrb[0].mxu0
      %v1215 = vadd.f32 0.0, %v1214
      %v1216 = vpop.f32.mrb[0].mxu0
      %1217 = vmatprep.mubr.bf16.mxu0 0
      %1218 = vmatmul.mubr.bf16.gmra.mrb[0].mxu0 %v1060
      %v1219 = vpop.f32.mrb[0].mxu0
      %v1220 = vadd.f32 0.0, %v1219
      %v1221 = vpop.f32.mrb[0].mxu0
      %v1222 = vpop.f32.mrb[0].mxu0
      %v1223 = vadd.f32 0.0, %v1222
      %v1224 = vpop.f32.mrb[0].mxu0
      %1225 = vmatprep.mubr.bf16.mxu0 0
      %1226 = vmatmul.mubr.bf16.gmra.mrb[0].mxu0 %v1061
      %v1227 = vpop.f32.mrb[0].mxu0
      %v1228 = vadd.f32 0.0, %v1227
      %v1229 = vpop.f32.mrb[0].mxu0
      %v1230 = vpop.f32.mrb[0].mxu0
      %v1231 = vadd.f32 0.0, %v1230
      %v1232 = vpop.f32.mrb[0].mxu0
      %1233 = vmatprep.mubr.bf16.mxu0 0
      %1234 = vmatmul.mubr.bf16.gmra.mrb[0].mxu0 %v1062
      %v1235 = vpop.f32.mrb[0].mxu0
      %v1236 = vadd.f32 0.0, %v1235
      %v1237 = vpop.f32.mrb[0].mxu0
      %v1238 = vpop.f32.mrb[0].mxu0
      %v1239 = vadd.f32 0.0, %v1238
      %v1240 = vpop.f32.mrb[0].mxu0
      %1241 = vmatprep.mubr.bf16.mxu0 0
      %1242 = vmatmul.mubr.bf16.gmra.mrb[0].mxu0 %v1063
      %v1243 = vpop.f32.mrb[0].mxu0
      %v1244 = vadd.f32 0.0, %v1243
      %v1245 = vpop.f32.mrb[0].mxu0
      %v1246 = vpop.f32.mrb[0].mxu0
      %v1247 = vadd.f32 0.0, %v1246
      %v1248 = vpop.f32.mrb[0].mxu0
      %1249 = vmatprep.mubr.bf16.mxu0 0
      %1250 = vmatmul.mubr.bf16.gmra.mrb[0].mxu0 %v1064
      %v1251 = vpop.f32.mrb[0].mxu0
      %v1252 = vadd.f32 0.0, %v1251
      %v1253 = vpop.f32.mrb[0].mxu0
      %v1254 = vpop.f32.mrb[0].mxu0
      %v1255 = vadd.f32 0.0, %v1254
      %v1256 = vpop.f32.mrb[0].mxu0
      %1257 = vdwg.mxu0
      %v1274 = vunpack.c.l.b16 %v1065
      %v1275 = vunpack.c.l.b16 %v1066
      %v1276 = vunpack.c.l.b16 %v1067
      %v1277 = vunpack.c.l.b16 %v1068
      %v1278 = vunpack.c.l.b16 %v1069
      %v1279 = vunpack.c.l.b16 %v1070
      %v1280 = vunpack.c.l.b16 %v1071
      %v1281 = vunpack.c.l.b16 %v1072
      %v1282 = vunpack.c.l.b16 %v1073
      %v1283 = vunpack.c.l.b16 %v1074
      %v1284 = vunpack.c.l.b16 %v1075
      %v1285 = vunpack.c.l.b16 %v1076
      %v1286 = vunpack.c.l.b16 %v1077
      %v1287 = vunpack.c.l.b16 %v1078
      %v1288 = vunpack.c.l.b16 %v1079
      %v1289 = vunpack.c.l.b16 %v1080
      %v1290 = vpack.c.b16 %v1275, %v1274
      %v1291 = vpack.c.b16 %v1277, %v1276
      %v1292 = vpack.c.b16 %v1279, %v1278
      %v1293 = vpack.c.b16 %v1281, %v1280
      %v1294 = vpack.c.b16 %v1283, %v1282
      %v1295 = vpack.c.b16 %v1285, %v1284
      %v1296 = vpack.c.b16 %v1287, %v1286
      %v1297 = vpack.c.b16 %v1289, %v1288
      %v1322 = vunpack.c.l.b16 %v1081
      %v1323 = vunpack.c.l.b16 %v1082
      %v1324 = vunpack.c.l.b16 %v1083
      %v1325 = vunpack.c.l.b16 %v1084
      %v1326 = vunpack.c.l.b16 %v1085
      %v1327 = vunpack.c.l.b16 %v1086
      %v1328 = vunpack.c.l.b16 %v1087
      %v1329 = vunpack.c.l.b16 %v1088
      %v1330 = vunpack.c.l.b16 %v1089
      %v1331 = vunpack.c.l.b16 %v1090
      %v1332 = vunpack.c.l.b16 %v1091
      %v1333 = vunpack.c.l.b16 %v1092
      %v1334 = vunpack.c.l.b16 %v1093
      %v1335 = vunpack.c.l.b16 %v1094
      %v1336 = vunpack.c.l.b16 %v1095
      %v1337 = vunpack.c.l.b16 %v1096
      %v1338 = vpack.c.b16 %v1323, %v1322
      %v1339 = vpack.c.b16 %v1325, %v1324
      %v1340 = vpack.c.b16 %v1327, %v1326
      %v1341 = vpack.c.b16 %v1329, %v1328
      %v1342 = vpack.c.b16 %v1331, %v1330
      %v1343 = vpack.c.b16 %v1333, %v1332
      %v1344 = vpack.c.b16 %v1335, %v1334
      %v1345 = vpack.c.b16 %v1337, %v1336
      %1354 = vmatprep.subr.bf16.mxu0 0
      %1355 = vmatpush1.bf16.msra.mxu0 %v1338
      %1356 = vmatprep.subr.bf16.mxu0 0
      %1357 = vmatpush1.bf16.msra.mxu0 %v1339
      %1358 = vmatprep.subr.bf16.mxu0 0
      %1359 = vmatpush1.bf16.msra.mxu0 %v1340
      %1360 = vmatprep.subr.bf16.mxu0 0
      %1361 = vmatpush1.bf16.msra.mxu0 %v1341
      %1362 = vmatprep.subr.bf16.mxu0 0
      %1363 = vmatpush1.bf16.msra.mxu0 %v1342
      %1364 = vmatprep.subr.bf16.mxu0 0
      %1365 = vmatpush1.bf16.msra.mxu0 %v1343
      %1366 = vmatprep.subr.bf16.mxu0 0
      %1367 = vmatpush1.bf16.msra.mxu0 %v1344
      %1368 = vmatprep.subr.bf16.mxu0 0
      %1369 = vmatpush1.bf16.msra.mxu0 %v1345
      %1370 = vmatprep.subr.bf16.mxu0 0
      %1371 = vmatpush1.bf16.msra.mxu0 0
      %1372 = vmatprep.subr.bf16.mxu0 0
      %1373 = vmatpush1.bf16.msra.mxu0 0
      %1374 = vmatprep.subr.bf16.mxu0 0
      %1375 = vmatpush1.bf16.msra.mxu0 0
      %1376 = vmatprep.subr.bf16.mxu0 0
      %1377 = vmatpush1.bf16.msra.mxu0 0
      %1378 = vmatprep.subr.bf16.mxu0 0
      %1379 = vmatpush1.bf16.msra.mxu0 0
      %1380 = vmatprep.subr.bf16.mxu0 0
      %1381 = vmatpush1.bf16.msra.mxu0 0
      %1382 = vmatprep.subr.bf16.mxu0 0
      %1383 = vmatpush1.bf16.msra.mxu0 0
      %1384 = vmatprep.subr.bf16.mxu0 0
      %1385 = vmatpush1.bf16.msra.mxu0 0
      %1386 = vmatprep.mubr.bf16.mxu0 0
      %1387 = vmatmul.mubr.bf16.gmra.mrb[0].mxu0 %v1290
      %v1388 = vpop.f32.mrb[0].mxu0
      %v1389 = vadd.f32 %v1196, %v1388
      %v1390 = vpop.f32.mrb[0].mxu0
      %v1391 = vpop.f32.mrb[0].mxu0
      %v1392 = vadd.f32 %v1199, %v1391
      %v1393 = vpop.f32.mrb[0].mxu0
      %1394 = vmatprep.mubr.bf16.mxu0 0
      %1395 = vmatmul.mubr.bf16.gmra.mrb[0].mxu0 %v1291
      %v1396 = vpop.f32.mrb[0].mxu0
      %v1397 = vadd.f32 %v1204, %v1396
      %v1398 = vpop.f32.mrb[0].mxu0
      %v1399 = vpop.f32.mrb[0].mxu0
      %v1400 = vadd.f32 %v1207, %v1399
      %v1401 = vpop.f32.mrb[0].mxu0
      %1402 = vmatprep.mubr.bf16.mxu0 0
      %1403 = vmatmul.mubr.bf16.gmra.mrb[0].mxu0 %v1292
      %v1404 = vpop.f32.mrb[0].mxu0
      %v1405 = vadd.f32 %v1212, %v1404
      %v1406 = vpop.f32.mrb[0].mxu0
      %v1407 = vpop.f32.mrb[0].mxu0
      %v1408 = vadd.f32 %v1215, %v1407
      %v1409 = vpop.f32.mrb[0].mxu0
      %1410 = vmatprep.mubr.bf16.mxu0 0
      %1411 = vmatmul.mubr.bf16.gmra.mrb[0].mxu0 %v1293
      %v1412 = vpop.f32.mrb[0].mxu0
      %v1413 = vadd.f32 %v1220, %v1412
      %v1414 = vpop.f32.mrb[0].mxu0
      %v1415 = vpop.f32.mrb[0].mxu0
      %v1416 = vadd.f32 %v1223, %v1415
      %v1417 = vpop.f32.mrb[0].mxu0
      %1418 = vmatprep.mubr.bf16.mxu0 0
      %1419 = vmatmul.mubr.bf16.gmra.mrb[0].mxu0 %v1294
      %v1420 = vpop.f32.mrb[0].mxu0
      %v1421 = vadd.f32 %v1228, %v1420
      %v1422 = vpop.f32.mrb[0].mxu0
      %v1423 = vpop.f32.mrb[0].mxu0
      %v1424 = vadd.f32 %v1231, %v1423
      %v1425 = vpop.f32.mrb[0].mxu0
      %1426 = vmatprep.mubr.bf16.mxu0 0
      %1427 = vmatmul.mubr.bf16.gmra.mrb[0].mxu0 %v1295
      %v1428 = vpop.f32.mrb[0].mxu0
      %v1429 = vadd.f32 %v1236, %v1428
      %v1430 = vpop.f32.mrb[0].mxu0
      %v1431 = vpop.f32.mrb[0].mxu0
      %v1432 = vadd.f32 %v1239, %v1431
      %v1433 = vpop.f32.mrb[0].mxu0
      %1434 = vmatprep.mubr.bf16.mxu0 0
      %1435 = vmatmul.mubr.bf16.gmra.mrb[0].mxu0 %v1296
      %v1436 = vpop.f32.mrb[0].mxu0
      %v1437 = vadd.f32 %v1244, %v1436
      %v1438 = vpop.f32.mrb[0].mxu0
      %v1439 = vpop.f32.mrb[0].mxu0
      %v1440 = vadd.f32 %v1247, %v1439
      %v1441 = vpop.f32.mrb[0].mxu0
      %1442 = vmatprep.mubr.bf16.mxu0 0
      %1443 = vmatmul.mubr.bf16.gmra.mrb[0].mxu0 %v1297
      %v1444 = vpop.f32.mrb[0].mxu0
      %v1445 = vadd.f32 %v1252, %v1444
      %v1446 = vpop.f32.mrb[0].mxu0
      %v1447 = vpop.f32.mrb[0].mxu0
      %v1448 = vadd.f32 %v1255, %v1447
      %v1449 = vpop.f32.mrb[0].mxu0
      %1450 = vdwg.mxu0
      %v1451 = vmax.f32 %v1389, 0.0
      %v1452 = vmax.f32 %v1392, 0.0
      %v1453 = vmax.f32 %v1397, 0.0
      %v1454 = vmax.f32 %v1400, 0.0
      %v1455 = vmax.f32 %v1405, 0.0
      %v1456 = vmax.f32 %v1408, 0.0
      %v1457 = vmax.f32 %v1413, 0.0
      %v1458 = vmax.f32 %v1416, 0.0
      %v1459 = vmax.f32 %v1421, 0.0
      %v1460 = vmax.f32 %v1424, 0.0
      %v1461 = vmax.f32 %v1429, 0.0
      %v1462 = vmax.f32 %v1432, 0.0
      %v1463 = vmax.f32 %v1437, 0.0
      %v1464 = vmax.f32 %v1440, 0.0
      %v1465 = vmax.f32 %v1445, 0.0
      %v1466 = vmax.f32 %v1448, 0.0
      %1467 = vst [vmem:[%s300] sm:$0xff] %v1451
      %1468 = vst [vmem:[%s300 + $0x8] sm:$0xff] %v1452
      %1469 = vst [vmem:[%s300 + $0x10] sm:$0xff] %v1453
      %1470 = vst [vmem:[%s300 + $0x18] sm:$0xff] %v1454
      %1471 = vst [vmem:[%s300 + $0x20] sm:$0xff] %v1455
      %1472 = vst [vmem:[%s300 + $0x28] sm:$0xff] %v1456
      %1473 = vst [vmem:[%s300 + $0x30] sm:$0xff] %v1457
      %1474 = vst [vmem:[%s300 + $0x38] sm:$0xff] %v1458
      %1475 = vst [vmem:[%s300 + $0x40] sm:$0xff] %v1459
      %1476 = vst [vmem:[%s300 + $0x48] sm:$0xff] %v1460
      %1477 = vst [vmem:[%s300 + $0x50] sm:$0xff] %v1461
      %1478 = vst [vmem:[%s300 + $0x58] sm:$0xff] %v1462
      %1479 = vst [vmem:[%s300 + $0x60] sm:$0xff] %v1463
      %1480 = vst [vmem:[%s300 + $0x68] sm:$0xff] %v1464
      %1481 = vst [vmem:[%s300 + $0x70] sm:$0xff] %v1465
      %1482 = vst [vmem:[%s300 + $0x78] sm:$0xff] %v1466
      %s1483 = smul.u32 16, %s17
      %p1484 = scmp.lt.s32.totalorder %s1483, 31
      %s1485 = scalar_select %p1484, %s1483, 31
      %s1486 = smul.addr %s1485, 8
      %s1487 = scalar_lea.vmem %s6, %s1486
      // Predicated region
      $region45: #{graphsage_forward.1} parent=43 // pred_check
        %p1488 = pneg %p176
      $region46: #{graphsage_forward.1} parent=43 // pred_check_branch
        %1490 = sbr.rel (%p1488) target = $region48
      $region47: #{graphsage_forward.1} parent=43 // pred_region
        %s1491 = smul.u32 16, %s17
      $region48: #{graphsage_forward.1} parent=43 // pred_fallthru
        _
    $region44: #{graphsage_forward.1} parent=5 // pred_fallthru
      _
    %p1492 = scmp.le.s32.totalorder 2, %s12
    // Predicated region
    $region49: #{graphsage_forward.1} parent=5 // pred_check
      %p1493 = pneg %p1492
    $region50: #{graphsage_forward.1} parent=5 // pred_check_branch
      %1495 = sbr.rel (%p1493) target = $region52
    $region51: #{graphsage_forward.1} parent=5 // pred_region
      %s1496 = ssub.s32 %s12, 2
      // Predicated region
      $region53: #{graphsage_forward.1} parent=51 // pred_check
        %p1497 = pneg %p182
      $region54: #{graphsage_forward.1} parent=51 // pred_check_branch
        %1499 = sbr.rel (%p1497) target = $region56
      $region55: #{graphsage_forward.1} parent=51 // pred_region
        %s1500 = smul.u32 16, %s18
        %p1501 = scmp.lt.s32.totalorder %s1500, 31
        %s1502 = scalar_select %p1501, %s1500, 31
        %s1503 = smul.addr %s1502, 8
        %s1504 = scalar_lea.vmem %s6, %s1503
      $region56: #{graphsage_forward.1} parent=51 // pred_fallthru
        _
    $region52: #{graphsage_forward.1} parent=5 // pred_fallthru
      _
  $region6: #{graphsage_forward.1} parent=0 // loop_footer
    %s16 = sadd.s32 1, %s12
  $region7: #{graphsage_forward.1} parent=0 // loop_footer_branch
    %11 = sbr.rel target = $region3
  $region8: #{graphsage_forward.1} parent=0 // loop_exit
    _

</llo_original>
